<compile_context>
chip_gen: v5e
topology: v5e:2x2
jax: 0.10.0
libtpu: 0.0.40
codegen_flags: <defaults>
</compile_context>

<pallas_src>
import jax
import jax.numpy as jnp
from jax import lax
from jax.experimental import pallas as pl
from jax.experimental.pallas import tpu as pltpu

_LANE = 128


def _round_up(x, m):
    return (x + m - 1) // m * m


def _cdiv(a, b):
    return (a + b - 1) // b


def _mappo_critic_kernel(x_ref, w1_ref, b1_ref, w2_ref, b2_ref, o_ref):
    # x_ref : [TB, D]    f32  (streamed per grid step, double-buffered by Pallas)
    # w1_ref: [D, H]     f32  (resident: constant index_map)
    # b1_ref: [1, H]     f32  (resident)
    # w2_ref: [1, H]     f32  (resident; layer-2 weight as a row)
    # b2_ref: [1, 1]     f32  (SMEM scalar)
    # o_ref : [1, 1, TB] f32  (lane-dense: batch lives in the lane dimension)
    h = jnp.dot(x_ref[...], w1_ref[...],
                preferred_element_type=jnp.float32)            # MXU -> [TB, H], f32
    h = jnp.maximum(h + b1_ref[...], 0.0)                      # VPU bias + ReLU

    # Layer 2: contract the hidden axis; batch lands in lanes -> dense [1, TB] row.
    # (The lane-axis contraction of h costs one XLU transpose per tile, which is hidden
    #  under the HBM-bound x DMA.)
    out_row = lax.dot_general(
        w2_ref[...], h,
        dimension_numbers=(((1,), (1,)), ((), ())),             # [1,H] . [TB,H]^T -> [1,TB]
        preferred_element_type=jnp.float32,
    )
    o_ref[...] = (out_row + b2_ref[0, 0])[None]                 # [1, 1, TB]


def mappo_critic_forward(full_obs, w1, b1, w2, b2, *,
                         max_block_rows=None,
                         vmem_limit_bytes=32 * 1024 * 1024):
    """full_obs: [B, D] float32 -> value: [B, 1] float32."""
    B, D = full_obs.shape
    H = w1.shape[1]

    # ---- Tile sizing: derive the batch tile from the VMEM budget, not a constant. ----
    D_pad = _round_up(D, _LANE)                       # lane-padded x row footprint
    H_pad = _round_up(H, _LANE)                       # lane-padded hidden footprint
    # Resident params (Pallas still allocates 2 buffers for them) + slack.
    weight_bytes = 2 * (_round_up(D, 8) * H_pad * 4 + 2 * 8 * H_pad * 4) + 4096
    budget = max(vmem_limit_bytes * 5 // 8 - weight_bytes, 256 * 1024)
    # Per batch-row VMEM bytes: x double-buffer (lane-padded f32) + h + its transposed copy.
    bytes_per_row = 2 * D_pad * 4 + 2 * H_pad * 4
    tb_cap = max(_LANE, budget // bytes_per_row // _LANE * _LANE)
    if max_block_rows is not None:
        tb_cap = min(tb_cap, max(_LANE, _round_up(max_block_rows, _LANE)))

    n_rows = _round_up(B, _LANE)                      # keep the [1,TB] output lane-dense
    num_tiles = _cdiv(n_rows, tb_cap)
    if n_rows >= 2 * _LANE:
        num_tiles = max(num_tiles, 2)                 # keep both v7x TensorCores busy
    TB = _round_up(_cdiv(n_rows, num_tiles), _LANE)
    num_tiles = _cdiv(n_rows, TB)
    Bp = num_tiles * TB

    # Stream x as f32 directly (no wrapper cast pass); pad only the ragged tail if needed.
    x = full_obs
    if Bp != B:
        x = jnp.pad(x, ((0, Bp - B), (0, 0)))
    w1f = w1.astype(jnp.float32)
    b1r = b1.reshape(1, H).astype(jnp.float32)
    w2r = w2.reshape(1, H).astype(jnp.float32)        # hidden axis in lanes
    b2s = b2.reshape(1, 1).astype(jnp.float32)

    cost = pl.CostEstimate(
        flops=2 * Bp * H * (D + 1),
        transcendentals=0,
        bytes_accessed=Bp * D * 4 + D * H * 4 + 2 * H * 4 + 4 + Bp * 4,
    )

    out_rows = pl.pallas_call(
        _mappo_critic_kernel,
        out_shape=jax.ShapeDtypeStruct((num_tiles, 1, TB), jnp.float32),
        grid_spec=pltpu.PrefetchScalarGridSpec(
            num_scalar_prefetch=0,
            grid=(num_tiles,),
            in_specs=[
                pl.BlockSpec((TB, D), lambda i: (i, 0)),              # x tile (streamed)
                pl.BlockSpec((D, H), lambda i: (0, 0)),               # W1 (resident)
                pl.BlockSpec((1, H), lambda i: (0, 0)),               # b1 (resident)
                pl.BlockSpec((1, H), lambda i: (0, 0)),               # W2 row (resident)
                pl.BlockSpec(memory_space=pltpu.MemorySpace.SMEM),    # b2 scalar
            ],
            out_specs=pl.BlockSpec((1, 1, TB), lambda i: (i, 0, 0)),  # lane-dense row per tile
        ),
        compiler_params=pltpu.CompilerParams(
            dimension_semantics=("parallel",),   # batch tiles are independent (v7x dual-TC)
            vmem_limit_bytes=vmem_limit_bytes,   # explicit -> tiling deterministic per-gen
        ),
        cost_estimate=cost,
    )(x, w1f, b1r, w2r, b2s)

    return out_rows.reshape(Bp, 1)[:B]


def init_params(key, full_obs_dim, hidden=64):
    """Deterministic init matching nn.Linear default (U[-1/sqrt(fan_in), 1/sqrt(fan_in)])."""
    k1, k2, k3, k4 = jax.random.split(key, 4)
    bound1 = 1.0 / jnp.sqrt(jnp.float32(full_obs_dim))
    bound2 = 1.0 / jnp.sqrt(jnp.float32(hidden))
    w1 = jax.random.uniform(k1, (full_obs_dim, hidden), jnp.float32, -bound1, bound1)
    b1 = jax.random.uniform(k2, (1, hidden), jnp.float32, -bound1, bound1)
    w2 = jax.random.uniform(k3, (hidden, 1), jnp.float32, -bound2, bound2)
    b2 = jax.random.uniform(k4, (1, 1), jnp.float32, -bound2, bound2)
    return w1, b1, w2, b2


def _reference(x, w1, b1, w2, b2):
    # True f32 reference (the kernel no longer casts anything to bf16).
    h = jnp.maximum(x @ w1 + b1.reshape(1, -1), 0.0)
    return h @ w2.reshape(-1, 1) + b2.reshape(1, 1)


if __name__ == "__main__":
    key = jax.random.PRNGKey(0)
    k_in, k_par, k_in2 = jax.random.split(key, 3)

    # Small demo shapes consistent with the module: batch=8 joint observations, full_obs_dim=32.
    B, D = 8, 32
    full_obs = jax.random.normal(k_in, (B, D), jnp.float32)
    w1, b1, w2, b2 = init_params(k_par, D)

    out = jax.block_until_ready(mappo_critic_forward(full_obs, w1, b1, w2, b2))
    ref = _reference(full_obs, w1, b1, w2, b2)
    assert out.shape == (B, 1)
    # Tolerance covers MXU-vs-XLA f32 matmul pass/accumulation-order differences.
    assert jnp.allclose(out, ref, atol=1e-2, rtol=1e-2)

    # Exercise the multi-tile / padded path: ragged batch, >=2 grid steps over batch tiles.
    B2 = 300
    obs2 = jax.random.normal(k_in2, (B2, D), jnp.float32)
    out2 = jax.block_until_ready(
        mappo_critic_forward(obs2, w1, b1, w2, b2, max_block_rows=128))
    ref2 = _reference(obs2, w1, b1, w2, b2)
    assert out2.shape == (B2, 1)
    assert jnp.allclose(out2, ref2, atol=1e-2, rtol=1e-2)

    print("KERNEL_OK")
</pallas_src>

<mosaic_0001>
module attributes {stable_mosaic.version = 11 : i64} {
  func.func @_mappo_critic_kernel(%arg0: i32, %arg1: memref<128x32xf32, #tpu.memory_space<vmem>>, %arg2: memref<32x64xf32, #tpu.memory_space<vmem>>, %arg3: memref<1x64xf32, #tpu.memory_space<vmem>>, %arg4: memref<1x64xf32, #tpu.memory_space<vmem>>, %arg5: memref<1x1xf32, #tpu.memory_space<smem>>, %arg6: memref<1x1x128xf32, #tpu.memory_space<vmem>>) attributes {dimension_semantics = [#tpu.dimension_semantics<parallel>], iteration_bounds = array<i64: 1>, scalar_prefetch = 0 : i64, scratch_operands = 0 : i64, tpu.core_type = #tpu.core_type<tc>, window_params = [{transform_indices = @transform_0, window_bounds = array<i64: 128, 32>}, {pipeline_mode = #tpu.pipeline_mode<synchronous>, transform_indices = @transform_1, window_bounds = array<i64: 32, 64>}, {pipeline_mode = #tpu.pipeline_mode<synchronous>, transform_indices = @transform_2, window_bounds = array<i64: 1, 64>}, {pipeline_mode = #tpu.pipeline_mode<synchronous>, transform_indices = @transform_3, window_bounds = array<i64: 1, 64>}, {transform_indices = @transform_4, window_bounds = array<i64: 1, 1>}, {transform_indices = @transform_5, window_bounds = array<i64: 1, 1, 128>}]} {
    %c0 = arith.constant 0 : index
    %c0_0 = arith.constant 0 : index
    %0 = vector.load %arg1[%c0, %c0_0] : memref<128x32xf32, #tpu.memory_space<vmem>>, vector<128x32xf32>
    %c0_1 = arith.constant 0 : index
    %c0_2 = arith.constant 0 : index
    %1 = vector.load %arg2[%c0_1, %c0_2] : memref<32x64xf32, #tpu.memory_space<vmem>>, vector<32x64xf32>
    %cst = arith.constant dense<0.000000e+00> : vector<128x64xf32>
    %2 = tpu.matmul %0, %1, %cst {dimension_numbers = #tpu.dot_dimension_numbers<[1], [0], [0], [1], [0, 0, 1, 1], [], []>} : vector<128x32xf32>, vector<32x64xf32>, vector<128x64xf32> -> vector<128x64xf32>
    %c0_3 = arith.constant 0 : index
    %c0_4 = arith.constant 0 : index
    %3 = vector.load %arg3[%c0_3, %c0_4] : memref<1x64xf32, #tpu.memory_space<vmem>>, vector<1x64xf32>
    %4 = vector.broadcast %3 : vector<1x64xf32> to vector<128x64xf32>
    %5 = arith.addf %2, %4 : vector<128x64xf32>
    %cst_5 = arith.constant 0.000000e+00 : f32
    %6 = vector.broadcast %cst_5 : f32 to vector<128x64xf32>
    %7 = arith.maximumf %5, %6 : vector<128x64xf32>
    %c0_6 = arith.constant 0 : index
    %c0_7 = arith.constant 0 : index
    %8 = vector.load %arg4[%c0_6, %c0_7] : memref<1x64xf32, #tpu.memory_space<vmem>>, vector<1x64xf32>
    %cst_8 = arith.constant dense<0.000000e+00> : vector<1x128xf32>
    %9 = tpu.matmul %8, %7, %cst_8 {dimension_numbers = #tpu.dot_dimension_numbers<[1], [1], [0], [0], [0, 0, 1, 0], [], []>} : vector<1x64xf32>, vector<128x64xf32>, vector<1x128xf32> -> vector<1x128xf32>
    %c0_9 = arith.constant 0 : index
    %c0_10 = arith.constant 0 : index
    %10 = memref.load %arg5[%c0_9, %c0_10] : memref<1x1xf32, #tpu.memory_space<smem>>
    %11 = vector.broadcast %10 : f32 to vector<1x128xf32>
    %12 = arith.addf %9, %11 : vector<1x128xf32>
    %13 = vector.shape_cast %12 : vector<1x128xf32> to vector<1x1x128xf32>
    %c0_11 = arith.constant 0 : index
    %c0_12 = arith.constant 0 : index
    %c0_13 = arith.constant 0 : index
    %14 = vector.load %arg6[%c0_11, %c0_12, %c0_13] : memref<1x1x128xf32, #tpu.memory_space<vmem>>, vector<1x1x128xf32>
    tpu.vector_store %arg6[%c0_11, %c0_12, %c0_13], %13 {strides = array<i32>} : memref<1x1x128xf32, #tpu.memory_space<vmem>>, vector<1x1x128xf32>,
    return
  }
  func.func @transform_0(%arg0: i32) -> (i32, i32) {
    %c0_i32 = arith.constant 0 : i32
    %c0_i32_0 = arith.constant 0 : i32
    return %arg0, %c0_i32 : i32, i32
  }
  func.func @transform_1(%arg0: i32) -> (i32, i32) {
    %c0_i32 = arith.constant 0 : i32
    %c0_i32_0 = arith.constant 0 : i32
    %c0_i32_1 = arith.constant 0 : i32
    return %c0_i32, %c0_i32_0 : i32, i32
  }
  func.func @transform_2(%arg0: i32) -> (i32, i32) {
    %c0_i32 = arith.constant 0 : i32
    %c0_i32_0 = arith.constant 0 : i32
    %c0_i32_1 = arith.constant 0 : i32
    return %c0_i32, %c0_i32_0 : i32, i32
  }
  func.func @transform_3(%arg0: i32) -> (i32, i32) {
    %c0_i32 = arith.constant 0 : i32
    %c0_i32_0 = arith.constant 0 : i32
    %c0_i32_1 = arith.constant 0 : i32
    return %c0_i32, %c0_i32_0 : i32, i32
  }
  func.func @transform_4(%arg0: i32) -> (i32, i32) {
    %c0_i32 = arith.constant 0 : i32
    %c0_i32_0 = arith.constant 0 : i32
    %c0_i32_1 = arith.constant 0 : i32
    return %c0_i32, %c0_i32_0 : i32, i32
  }
  func.func @transform_5(%arg0: i32) -> (i32, i32, i32) {
    %c0_i32 = arith.constant 0 : i32
    %c0_i32_0 = arith.constant 0 : i32
    %c0_i32_1 = arith.constant 0 : i32
    return %arg0, %c0_i32, %c0_i32_0 : i32, i32, i32
  }
}

</mosaic_0001>

<llo_original>
// kernel: tpu_custom_call.1
$region0: #{tpu_custom_call.1}
  #allocation0 [shape = 'u32[]', space=smem, size = 0x4, offset = 0x4, fixed_abs, tag = 'smem constant byte address 0x4 - core index']
  #allocation1 [shape = 'u32[72,128]{1,0:T(1,128)}', space=vmem, size = 0x9000, scoped, tag = 'internal scratch']
  #allocation2 [shape = 'f32[1,1]{1,0:T(1,128)S(6)}', space=smem, size = 0x200, scoped, tag = 'scoped memory for tpu_custom_call.1']
  %s0 = inlined_call_operand.vmem [shape: f32[128,32], index: 0, kind: input, shape index: {}]
  %s1 = inlined_call_operand.vmem [shape: f32[32,64], index: 1, kind: input, shape index: {}]
  %s2 = inlined_call_operand.vmem [shape: f32[1,64], index: 2, kind: input, shape index: {}]
  %s3 = inlined_call_operand.vmem [shape: f32[1,64], index: 3, kind: input, shape index: {}]
  %s4 = inlined_call_operand.<no memory space> [shape: f32[1,1], index: 4, kind: input, shape index: {}]
  %s5 = inlined_call_operand.hbm [shape: f32[1,1,128], index: 5, kind: output, shape index: {}]
  %s6 = sld [smem:[#allocation0]]
  $region30: #{tpu_custom_call.1} parent=0
    _
  %s8 = ssub.s32 1, %s6
  %s9 = scalar_select 0, %s8, %s6
  %10 = sst [smem:[#allocation2]] %s4
  $region1: #{tpu_custom_call.1} parent=0
    #allocation3 [shape = 'u8[512]{0}', space=vmem, size = 0x400, scoped, tag = 'output window, operand 0, single buffered']
    #allocation4 [shape = 's32[1]{0}', space=sflag, size = 0x4, scoped, tag = 'scoped memory for tpu_custom_call.1']
    %11 = vsyncpa [#allocation4], 0
    // Predicated region
    $region2: #{tpu_custom_call.1} parent=1 // pred_check
      _
    $region3: #{tpu_custom_call.1} parent=1 // pred_check_branch
      %13 = sbr.rel (0) target = $region5
    $region4: #{tpu_custom_call.1} parent=1 // pred_region
      _
    $region5: #{tpu_custom_call.1} parent=1 // pred_fallthru
      _
    // Predicated region
    $region6: #{tpu_custom_call.1} parent=1 // pred_check
      _
    $region7: #{tpu_custom_call.1} parent=1 // pred_check_branch
      %15 = sbr.rel (0) target = $region9
    $region8: #{tpu_custom_call.1} parent=1 // pred_region
      _
    $region9: #{tpu_custom_call.1} parent=1 // pred_fallthru
      _
    // Predicated region
    $region10: #{tpu_custom_call.1} parent=1 // pred_check
      _
    $region11: #{tpu_custom_call.1} parent=1 // pred_check_branch
      %17 = sbr.rel (0) target = $region13
    $region12: #{tpu_custom_call.1} parent=1 // pred_region
      _
    $region13: #{tpu_custom_call.1} parent=1 // pred_fallthru
      _
    // Predicated region
    $region14: #{tpu_custom_call.1} parent=1 // pred_check
      _
    $region15: #{tpu_custom_call.1} parent=1 // pred_check_branch
      %19 = sbr.rel (0) target = $region17
    $region16: #{tpu_custom_call.1} parent=1 // pred_region
      _
    $region17: #{tpu_custom_call.1} parent=1 // pred_fallthru
      _
    // Predicated region
    $region18: #{tpu_custom_call.1} parent=1 // pred_check
      _
    $region19: #{tpu_custom_call.1} parent=1 // pred_check_branch
      %21 = sbr.rel (0) target = $region21
    $region20: #{tpu_custom_call.1} parent=1 // pred_region
      _
    $region21: #{tpu_custom_call.1} parent=1 // pred_fallthru
      _
    %v22 = vld [vmem:[%s0] sm:$0xff]
    %v23 = vld [vmem:[%s0 + $0x8] sm:$0xff]
    %v24 = vld [vmem:[%s0 + $0x10] sm:$0xff]
    %v25 = vld [vmem:[%s0 + $0x18] sm:$0xff]
    %v26 = vld [vmem:[%s0 + $0x20] sm:$0xff]
    %v27 = vld [vmem:[%s0 + $0x28] sm:$0xff]
    %v28 = vld [vmem:[%s0 + $0x30] sm:$0xff]
    %v29 = vld [vmem:[%s0 + $0x38] sm:$0xff]
    %v30 = vld [vmem:[%s0 + $0x40] sm:$0xff]
    %v31 = vld [vmem:[%s0 + $0x48] sm:$0xff]
    %v32 = vld [vmem:[%s0 + $0x50] sm:$0xff]
    %v33 = vld [vmem:[%s0 + $0x58] sm:$0xff]
    %v34 = vld [vmem:[%s0 + $0x60] sm:$0xff]
    %v35 = vld [vmem:[%s0 + $0x68] sm:$0xff]
    %v36 = vld [vmem:[%s0 + $0x70] sm:$0xff]
    %v37 = vld [vmem:[%s0 + $0x78] sm:$0xff]
    %v38 = vld [vmem:[%s1] sm:$0xff]
    %v39 = vld [vmem:[%s1 + $0x8] sm:$0xff]
    %v40 = vld [vmem:[%s1 + $0x10] sm:$0xff]
    %v41 = vld [vmem:[%s1 + $0x18] sm:$0xff]
    %v42 = vld [vmem:[%s2] sm:$0x1]
    %v44 = vperm.slane %v42, 0
    %vm46 = vcmask 261120
    %v48 = vsel %vm46, %v22, 0
    %v51 = vsel %vm46, %v23, 0
    %v54 = vsel %vm46, %v24, 0
    %v57 = vsel %vm46, %v25, 0
    %v60 = vsel %vm46, %v26, 0
    %v63 = vsel %vm46, %v27, 0
    %v66 = vsel %vm46, %v28, 0
    %v69 = vsel %vm46, %v29, 0
    %v72 = vsel %vm46, %v30, 0
    %v75 = vsel %vm46, %v31, 0
    %v78 = vsel %vm46, %v32, 0
    %v81 = vsel %vm46, %v33, 0
    %v84 = vsel %vm46, %v34, 0
    %v87 = vsel %vm46, %v35, 0
    %v90 = vsel %vm46, %v36, 0
    %v93 = vsel %vm46, %v37, 0
    %95 = vmatpush.msra.mxu0 0.0
    %96 = vmatpush.msra.mxu0 0.0
    %97 = vmatpush.msra.mxu0 0.0
    %98 = vmatpush.msra.mxu0 0.0
    %99 = vmatpush.msra.mxu0 0.0
    %100 = vmatpush.msra.mxu0 0.0
    %101 = vmatpush.msra.mxu0 0.0
    %102 = vmatpush.msra.mxu0 0.0
    %103 = vmatpush.msra.mxu0 0.0
    %104 = vmatpush.msra.mxu0 0.0
    %105 = vmatpush.msra.mxu0 0.0
    %106 = vmatpush.msra.mxu0 0.0
    %107 = vmatpush.msra.mxu0 %v41
    %108 = vmatpush.msra.mxu0 %v40
    %109 = vmatpush.msra.mxu0 %v39
    %110 = vmatpush.msra.mxu0 %v38
    %111 = vmatmul.f32.gmra.mxu0 %v48
    %v112 = vpop.f32.mrf.mxu0
    %v113 = vadd.f32 %v44, %v112
    %114 = vmatmul.f32.gmra.mxu0 %v51
    %v115 = vpop.f32.mrf.mxu0
    %v116 = vadd.f32 %v44, %v115
    %117 = vmatmul.f32.gmra.mxu0 %v54
    %v118 = vpop.f32.mrf.mxu0
    %v119 = vadd.f32 %v44, %v118
    %120 = vmatmul.f32.gmra.mxu0 %v57
    %v121 = vpop.f32.mrf.mxu0
    %v122 = vadd.f32 %v44, %v121
    %123 = vmatmul.f32.gmra.mxu0 %v60
    %v124 = vpop.f32.mrf.mxu0
    %v125 = vadd.f32 %v44, %v124
    %126 = vmatmul.f32.gmra.mxu0 %v63
    %v127 = vpop.f32.mrf.mxu0
    %v128 = vadd.f32 %v44, %v127
    %129 = vmatmul.f32.gmra.mxu0 %v66
    %v130 = vpop.f32.mrf.mxu0
    %v131 = vadd.f32 %v44, %v130
    %132 = vmatmul.f32.gmra.mxu0 %v69
    %v133 = vpop.f32.mrf.mxu0
    %v134 = vadd.f32 %v44, %v133
    %135 = vmatmul.f32.gmra.mxu0 %v72
    %v136 = vpop.f32.mrf.mxu0
    %v137 = vadd.f32 %v44, %v136
    %138 = vmatmul.f32.gmra.mxu0 %v75
    %v139 = vpop.f32.mrf.mxu0
    %v140 = vadd.f32 %v44, %v139
    %141 = vmatmul.f32.gmra.mxu0 %v78
    %v142 = vpop.f32.mrf.mxu0
    %v143 = vadd.f32 %v44, %v142
    %144 = vmatmul.f32.gmra.mxu0 %v81
    %v145 = vpop.f32.mrf.mxu0
    %v146 = vadd.f32 %v44, %v145
    %147 = vmatmul.f32.gmra.mxu0 %v84
    %v148 = vpop.f32.mrf.mxu0
    %v149 = vadd.f32 %v44, %v148
    %150 = vmatmul.f32.gmra.mxu0 %v87
    %v151 = vpop.f32.mrf.mxu0
    %v152 = vadd.f32 %v44, %v151
    %153 = vmatmul.f32.gmra.mxu0 %v90
    %v154 = vpop.f32.mrf.mxu0
    %v155 = vadd.f32 %v44, %v154
    %156 = vmatmul.f32.gmra.mxu0 %v93
    %v157 = vpop.f32.mrf.mxu0
    %v158 = vadd.f32 %v44, %v157
    %159 = vdwg.mxu0
    %v160 = vmax.f32 %v113, 0.0
    %v161 = vmax.f32 %v116, 0.0
    %v162 = vmax.f32 %v119, 0.0
    %v163 = vmax.f32 %v122, 0.0
    %v164 = vmax.f32 %v125, 0.0
    %v165 = vmax.f32 %v128, 0.0
    %v166 = vmax.f32 %v131, 0.0
    %v167 = vmax.f32 %v134, 0.0
    %v168 = vmax.f32 %v137, 0.0
    %v169 = vmax.f32 %v140, 0.0
    %v170 = vmax.f32 %v143, 0.0
    %v171 = vmax.f32 %v146, 0.0
    %v172 = vmax.f32 %v149, 0.0
    %v173 = vmax.f32 %v152, 0.0
    %v174 = vmax.f32 %v155, 0.0
    %v175 = vmax.f32 %v158, 0.0
    %v176 = vld [vmem:[%s3] sm:$0x1]
    %s177 = sld [smem:[#allocation2]]
    %v178 = vstv %s177
    %vm179 = vcmask 523264
    %v181 = vsel %vm179, %v176, 0
    %v184 = vsel %vm179, %v160, 0
    %v187 = vsel %vm179, %v161, 0
    %v190 = vsel %vm179, %v162, 0
    %v193 = vsel %vm179, %v163, 0
    %v196 = vsel %vm179, %v164, 0
    %v199 = vsel %vm179, %v165, 0
    %v202 = vsel %vm179, %v166, 0
    %v205 = vsel %vm179, %v167, 0
    %v208 = vsel %vm179, %v168, 0
    %v211 = vsel %vm179, %v169, 0
    %v214 = vsel %vm179, %v170, 0
    %v217 = vsel %vm179, %v171, 0
    %v220 = vsel %vm179, %v172, 0
    %v223 = vsel %vm179, %v173, 0
    %v226 = vsel %vm179, %v174, 0
    %v229 = vsel %vm179, %v175, 0
    %231 = vmatpush.xpose.msra.mxu0 %v229
    %232 = vmatpush.xpose.msra.mxu0 %v226
    %233 = vmatpush.xpose.msra.mxu0 %v223
    %234 = vmatpush.xpose.msra.mxu0 %v220
    %235 = vmatpush.xpose.msra.mxu0 %v217
    %236 = vmatpush.xpose.msra.mxu0 %v214
    %237 = vmatpush.xpose.msra.mxu0 %v211
    %238 = vmatpush.xpose.msra.mxu0 %v208
    %239 = vmatpush.xpose.msra.mxu0 %v205
    %240 = vmatpush.xpose.msra.mxu0 %v202
    %241 = vmatpush.xpose.msra.mxu0 %v199
    %242 = vmatpush.xpose.msra.mxu0 %v196
    %243 = vmatpush.xpose.msra.mxu0 %v193
    %244 = vmatpush.xpose.msra.mxu0 %v190
    %245 = vmatpush.xpose.msra.mxu0 %v187
    %246 = vmatpush.xpose.msra.mxu0 %v184
    %247 = vmatmul.f32.gmra.mxu0 %v181
    %v248 = vpop.f32.mrf.mxu0
    %v249 = vadd.f32 %v178, %v248
    %250 = vdwg.mxu0
    %251 = vst [vmem:[#allocation3] sm:$0x1] %v249
    // Predicated region
    $region22: #{tpu_custom_call.1} parent=1 // pred_check
      _
    $region23: #{tpu_custom_call.1} parent=1 // pred_check_branch
      %253 = sbr.rel (0) target = $region25
    $region24: #{tpu_custom_call.1} parent=1 // pred_region
      %255 = vsyncadd [#allocation4], 0
      %s257 = sshll.u32 [#allocation3], 4
      %s258 = int_to_ptr.vmem [resolvable:$true] %s257
      %s259 = sshll.u32 %s5, 4
      %s260 = int_to_ptr.hbm [resolvable:$true] %s259
      %262 = dma.vmem_to_hbm [thread:$0]  %s258, 16, %s260, [#allocation4]
    $region25: #{tpu_custom_call.1} parent=1 // pred_fallthru
      _
    // Predicated region
    $region26: #{tpu_custom_call.1} parent=1 // pred_check
      _
    $region27: #{tpu_custom_call.1} parent=1 // pred_check_branch
      %264 = sbr.rel (0) target = $region29
    $region28: #{tpu_custom_call.1} parent=1 // pred_region
      %266 = dma.done [#allocation4], 16
    $region29: #{tpu_custom_call.1} parent=1 // pred_fallthru
      _
    %267 = vsyncpa [#allocation4], 1

</llo_original>
